<compile_context>
chip_gen: v6e
topology: v6e:2x2x1
jax: 0.10.0
libtpu: 0.0.40
codegen_flags: <defaults>
</compile_context>

<pallas_src>
import jax
import jax.numpy as jnp
from jax.experimental import pallas as pl
from jax.experimental.pallas import tpu as pltpu


def _round_up(x, m):
    return (x + m - 1) // m * m


def qnetwork_kernel(x_ref, w1_ref, b1_ref, w2_ref, b2_ref, w3_ref, b3_ref, o_ref):
    # x tile (TB, D) f32 streamed from HBM; cast to bf16 in-kernel (VPU, hidden
    # under the DMA).  Weights bf16 (in, out), biases f32 (1, out).
    x = x_ref[...].astype(jnp.bfloat16)
    h1 = jnp.dot(x, w1_ref[...], preferred_element_type=jnp.float32) + b1_ref[...]
    h1 = jnp.maximum(h1, 0.0)
    h2 = jnp.dot(h1.astype(jnp.bfloat16), w2_ref[...],
                 preferred_element_type=jnp.float32) + b2_ref[...]
    h2 = jnp.maximum(h2, 0.0)
    out = jnp.dot(h2.astype(jnp.bfloat16), w3_ref[...],
                  preferred_element_type=jnp.float32) + b3_ref[...]
    o_ref[...] = out.astype(o_ref.dtype)


def qnetwork_forward(x, params, *, block_b=2048):
    """x: (B, *obs_shape) f32. Returns (B, act_dim) f32 Q-values."""
    B = x.shape[0]
    x2d = x.reshape(B, -1)          # same as torch .view(B, -1); f32, no cast here
    D = x2d.shape[1]

    # astype is a no-op when init_params already stored bf16 weights / f32 biases.
    w1 = params["w1"].astype(jnp.bfloat16)
    w2 = params["w2"].astype(jnp.bfloat16)
    w3 = params["w3"].astype(jnp.bfloat16)
    b1 = params["b1"].reshape(1, -1).astype(jnp.float32)
    b2 = params["b2"].reshape(1, -1).astype(jnp.float32)
    b3 = params["b3"].reshape(1, -1).astype(jnp.float32)
    H = w1.shape[1]
    A = w3.shape[1]

    # ---- batch tiling ------------------------------------------------------
    # TB multiple of 8 (f32 sublane packing).  Keep >=2 grid steps when the
    # batch is big enough so v7x can shard the "parallel" axis over its 2 TCs.
    TB = min(block_b, _round_up(B, 8))
    if B >= 1024:
        TB = min(TB, _round_up((B + 1) // 2, 8))
    TB = _round_up(TB, 8)
    Bp = _round_up(B, TB)
    if Bp != B:
        # Only triggers when B is not a multiple of TB (no-op at deployment
        # batch sizes); padded rows are sliced off below.
        x2d = jnp.pad(x2d, ((0, Bp - B), (0, 0)))
    grid = (Bp // TB,)

    cost = pl.CostEstimate(
        flops=2 * Bp * (D * H + H * H + H * A),
        transcendentals=0,
        bytes_accessed=(Bp * D * 4 + Bp * A * 4              # f32 x in, f32 out
                        + (D * H + H * H + H * A) * 2        # bf16 weights
                        + (H + H + A) * 4),                  # f32 biases
    )

    out_padded = pl.pallas_call(
        qnetwork_kernel,
        out_shape=jax.ShapeDtypeStruct((Bp, A), jnp.float32),
        grid=grid,
        in_specs=[
            pl.BlockSpec((TB, D), lambda i: (i, 0)),   # x tile streams over the grid
            pl.BlockSpec((D, H), lambda i: (0, 0)),    # weights / biases stay resident
            pl.BlockSpec((1, H), lambda i: (0, 0)),
            pl.BlockSpec((H, H), lambda i: (0, 0)),
            pl.BlockSpec((1, H), lambda i: (0, 0)),
            pl.BlockSpec((H, A), lambda i: (0, 0)),
            pl.BlockSpec((1, A), lambda i: (0, 0)),
        ],
        out_specs=pl.BlockSpec((TB, A), lambda i: (i, 0)),
        compiler_params=pltpu.CompilerParams(
            dimension_semantics=("parallel",),   # v7x: shard batch across 2 TCs
        ),
        cost_estimate=cost,
    )(x2d, w1, b1, w2, b2, w3, b3)

    return out_padded[:B, :A]


def init_params(key, obs_dim, hidden, act_dim):
    """Deterministic synthetic init (PyTorch-Linear-like uniform fan-in scaling).

    Weights are stored pre-transposed to (in, out) and pre-cast to bf16 so the
    forward path does no per-call casting / reshaping; biases stay f32.
    """
    ks = jax.random.split(key, 6)

    def linear(kw, kb, fan_in, fan_out):
        bound = 1.0 / jnp.sqrt(fan_in)
        w = jax.random.uniform(kw, (fan_in, fan_out), jnp.float32, -bound, bound)
        b = jax.random.uniform(kb, (1, fan_out), jnp.float32, -bound, bound)
        return w.astype(jnp.bfloat16), b

    w1, b1 = linear(ks[0], ks[1], obs_dim, hidden)
    w2, b2 = linear(ks[2], ks[3], hidden, hidden)
    w3, b3 = linear(ks[4], ks[5], hidden, act_dim)
    return {"w1": w1, "b1": b1, "w2": w2, "b2": b2, "w3": w3, "b3": b3}


def reference_forward(x, params):
    """Plain-JAX reference with the same bf16-stream / f32-accumulate numerics."""
    B = x.shape[0]
    h = x.reshape(B, -1).astype(jnp.bfloat16)
    h = jnp.maximum(
        jnp.dot(h, params["w1"].astype(jnp.bfloat16),
                preferred_element_type=jnp.float32) + params["b1"], 0.0)
    h = jnp.maximum(
        jnp.dot(h.astype(jnp.bfloat16), params["w2"].astype(jnp.bfloat16),
                preferred_element_type=jnp.float32) + params["b2"], 0.0)
    return (jnp.dot(h.astype(jnp.bfloat16), params["w3"].astype(jnp.bfloat16),
                    preferred_element_type=jnp.float32) + params["b3"])


if __name__ == "__main__":
    key = jax.random.PRNGKey(0)
    k_x, k_p = jax.random.split(key)

    # Small shapes consistent with the module:
    #   observation_space.shape = (4, 4)  -> obs_dim = 16
    #   action_space.shape[0]   = 8
    B, OBS_SHAPE, HIDDEN, ACT = 2, (4, 4), 64, 8
    obs_dim = 1
    for s in OBS_SHAPE:
        obs_dim *= s

    x = jax.random.normal(k_x, (B,) + OBS_SHAPE, jnp.float32)
    params = init_params(k_p, obs_dim, HIDDEN, ACT)

    out = qnetwork_forward(x, params)
    out = jax.block_until_ready(out)

    ref = reference_forward(x, params)
    assert out.shape == (B, ACT), out.shape
    assert jnp.allclose(out, ref, atol=1e-2, rtol=1e-2), "mismatch vs reference"

    # TODO(synk): for a DQN acting loop the epsilon-greedy argmax over the 8
    # Q-values could be fused into the kernel (emit (TB,) int32) to shrink the
    # output writeback another ~8x — not done here to preserve the module's
    # "return Q-values" forward semantics.
    print("KERNEL_OK")
</pallas_src>

<mosaic_0001>
module attributes {stable_mosaic.version = 11 : i64} {
  func.func @qnetwork_kernel(%arg0: i32, %arg1: memref<8x16xf32, #tpu.memory_space<vmem>>, %arg2: memref<16x64xbf16, #tpu.memory_space<vmem>>, %arg3: memref<1x64xf32, #tpu.memory_space<vmem>>, %arg4: memref<64x64xbf16, #tpu.memory_space<vmem>>, %arg5: memref<1x64xf32, #tpu.memory_space<vmem>>, %arg6: memref<64x8xbf16, #tpu.memory_space<vmem>>, %arg7: memref<1x8xf32, #tpu.memory_space<vmem>>, %arg8: memref<8x8xf32, #tpu.memory_space<vmem>>) attributes {dimension_semantics = [#tpu.dimension_semantics<parallel>], iteration_bounds = array<i64: 1>, scalar_prefetch = 0 : i64, scratch_operands = 0 : i64, tpu.core_type = #tpu.core_type<tc>, window_params = [{transform_indices = @transform_0, window_bounds = array<i64: 8, 16>}, {pipeline_mode = #tpu.pipeline_mode<synchronous>, transform_indices = @transform_1, window_bounds = array<i64: 16, 64>}, {pipeline_mode = #tpu.pipeline_mode<synchronous>, transform_indices = @transform_2, window_bounds = array<i64: 1, 64>}, {pipeline_mode = #tpu.pipeline_mode<synchronous>, transform_indices = @transform_3, window_bounds = array<i64: 64, 64>}, {pipeline_mode = #tpu.pipeline_mode<synchronous>, transform_indices = @transform_4, window_bounds = array<i64: 1, 64>}, {pipeline_mode = #tpu.pipeline_mode<synchronous>, transform_indices = @transform_5, window_bounds = array<i64: 64, 8>}, {pipeline_mode = #tpu.pipeline_mode<synchronous>, transform_indices = @transform_6, window_bounds = array<i64: 1, 8>}, {transform_indices = @transform_7, window_bounds = array<i64: 8, 8>}]} {
    %c0 = arith.constant 0 : index
    %c0_0 = arith.constant 0 : index
    %0 = vector.load %arg1[%c0, %c0_0] : memref<8x16xf32, #tpu.memory_space<vmem>>, vector<8x16xf32>
    %1 = arith.truncf %0 : vector<8x16xf32> to vector<8x16xbf16>
    %c0_1 = arith.constant 0 : index
    %c0_2 = arith.constant 0 : index
    %2 = vector.load %arg2[%c0_1, %c0_2] : memref<16x64xbf16, #tpu.memory_space<vmem>>, vector<16x64xbf16>
    %cst = arith.constant dense<0.000000e+00> : vector<8x64xf32>
    %3 = tpu.matmul %1, %2, %cst {dimension_numbers = #tpu.dot_dimension_numbers<[1], [0], [0], [1], [0, 0, 1, 1], [], []>} : vector<8x16xbf16>, vector<16x64xbf16>, vector<8x64xf32> -> vector<8x64xf32>
    %c0_3 = arith.constant 0 : index
    %c0_4 = arith.constant 0 : index
    %4 = vector.load %arg3[%c0_3, %c0_4] : memref<1x64xf32, #tpu.memory_space<vmem>>, vector<1x64xf32>
    %5 = vector.broadcast %4 : vector<1x64xf32> to vector<8x64xf32>
    %6 = arith.addf %3, %5 : vector<8x64xf32>
    %cst_5 = arith.constant 0.000000e+00 : f32
    %7 = vector.broadcast %cst_5 : f32 to vector<8x64xf32>
    %8 = arith.maximumf %6, %7 : vector<8x64xf32>
    %9 = arith.truncf %8 : vector<8x64xf32> to vector<8x64xbf16>
    %c0_6 = arith.constant 0 : index
    %c0_7 = arith.constant 0 : index
    %10 = vector.load %arg4[%c0_6, %c0_7] : memref<64x64xbf16, #tpu.memory_space<vmem>>, vector<64x64xbf16>
    %cst_8 = arith.constant dense<0.000000e+00> : vector<8x64xf32>
    %11 = tpu.matmul %9, %10, %cst_8 {dimension_numbers = #tpu.dot_dimension_numbers<[1], [0], [0], [1], [0, 0, 1, 1], [], []>} : vector<8x64xbf16>, vector<64x64xbf16>, vector<8x64xf32> -> vector<8x64xf32>
    %c0_9 = arith.constant 0 : index
    %c0_10 = arith.constant 0 : index
    %12 = vector.load %arg5[%c0_9, %c0_10] : memref<1x64xf32, #tpu.memory_space<vmem>>, vector<1x64xf32>
    %13 = vector.broadcast %12 : vector<1x64xf32> to vector<8x64xf32>
    %14 = arith.addf %11, %13 : vector<8x64xf32>
    %cst_11 = arith.constant 0.000000e+00 : f32
    %15 = vector.broadcast %cst_11 : f32 to vector<8x64xf32>
    %16 = arith.maximumf %14, %15 : vector<8x64xf32>
    %17 = arith.truncf %16 : vector<8x64xf32> to vector<8x64xbf16>
    %c0_12 = arith.constant 0 : index
    %c0_13 = arith.constant 0 : index
    %18 = vector.load %arg6[%c0_12, %c0_13] : memref<64x8xbf16, #tpu.memory_space<vmem>>, vector<64x8xbf16>
    %cst_14 = arith.constant dense<0.000000e+00> : vector<8x8xf32>
    %19 = tpu.matmul %17, %18, %cst_14 {dimension_numbers = #tpu.dot_dimension_numbers<[1], [0], [0], [1], [0, 0, 1, 1], [], []>} : vector<8x64xbf16>, vector<64x8xbf16>, vector<8x8xf32> -> vector<8x8xf32>
    %c0_15 = arith.constant 0 : index
    %c0_16 = arith.constant 0 : index
    %20 = vector.load %arg7[%c0_15, %c0_16] : memref<1x8xf32, #tpu.memory_space<vmem>>, vector<1x8xf32>
    %21 = vector.broadcast %20 : vector<1x8xf32> to vector<8x8xf32>
    %22 = arith.addf %19, %21 : vector<8x8xf32>
    %c0_17 = arith.constant 0 : index
    %c0_18 = arith.constant 0 : index
    %23 = vector.load %arg8[%c0_17, %c0_18] : memref<8x8xf32, #tpu.memory_space<vmem>>, vector<8x8xf32>
    tpu.vector_store %arg8[%c0_17, %c0_18], %22 {strides = array<i32>} : memref<8x8xf32, #tpu.memory_space<vmem>>, vector<8x8xf32>,
    return
  }
  func.func @transform_0(%arg0: i32) -> (i32, i32) {
    %c0_i32 = arith.constant 0 : i32
    %c0_i32_0 = arith.constant 0 : i32
    return %arg0, %c0_i32 : i32, i32
  }
  func.func @transform_1(%arg0: i32) -> (i32, i32) {
    %c0_i32 = arith.constant 0 : i32
    %c0_i32_0 = arith.constant 0 : i32
    %c0_i32_1 = arith.constant 0 : i32
    return %c0_i32, %c0_i32_0 : i32, i32
  }
  func.func @transform_2(%arg0: i32) -> (i32, i32) {
    %c0_i32 = arith.constant 0 : i32
    %c0_i32_0 = arith.constant 0 : i32
    %c0_i32_1 = arith.constant 0 : i32
    return %c0_i32, %c0_i32_0 : i32, i32
  }
  func.func @transform_3(%arg0: i32) -> (i32, i32) {
    %c0_i32 = arith.constant 0 : i32
    %c0_i32_0 = arith.constant 0 : i32
    %c0_i32_1 = arith.constant 0 : i32
    return %c0_i32, %c0_i32_0 : i32, i32
  }
  func.func @transform_4(%arg0: i32) -> (i32, i32) {
    %c0_i32 = arith.constant 0 : i32
    %c0_i32_0 = arith.constant 0 : i32
    %c0_i32_1 = arith.constant 0 : i32
    return %c0_i32, %c0_i32_0 : i32, i32
  }
  func.func @transform_5(%arg0: i32) -> (i32, i32) {
    %c0_i32 = arith.constant 0 : i32
    %c0_i32_0 = arith.constant 0 : i32
    %c0_i32_1 = arith.constant 0 : i32
    return %c0_i32, %c0_i32_0 : i32, i32
  }
  func.func @transform_6(%arg0: i32) -> (i32, i32) {
    %c0_i32 = arith.constant 0 : i32
    %c0_i32_0 = arith.constant 0 : i32
    %c0_i32_1 = arith.constant 0 : i32
    return %c0_i32, %c0_i32_0 : i32, i32
  }
  func.func @transform_7(%arg0: i32) -> (i32, i32) {
    %c0_i32 = arith.constant 0 : i32
    %c0_i32_0 = arith.constant 0 : i32
    return %arg0, %c0_i32 : i32, i32
  }
}

</mosaic_0001>

<llo_original>
// kernel: tpu_custom_call.1
$region0: #{tpu_custom_call.1}
  #allocation0 [shape = 'u32[]', space=smem, size = 0x4, offset = 0x4, fixed_abs, tag = 'smem constant byte address 0x4 - core index']
  #allocation1 [shape = 'u32[144,128]{1,0:T(1,128)}', space=vmem, size = 0x12000, scoped, tag = 'internal scratch']
  %s0 = inlined_call_operand.vmem [shape: f32[8,16], index: 0, kind: input, shape index: {}]
  %s1 = inlined_call_operand.hbm [shape: bf16[16,64], index: 1, kind: input, shape index: {}]
  %s2 = inlined_call_operand.vmem [shape: f32[1,64], index: 2, kind: input, shape index: {}]
  %s3 = inlined_call_operand.vmem [shape: bf16[64,64], index: 3, kind: input, shape index: {}]
  %s4 = inlined_call_operand.hbm [shape: f32[1,64], index: 4, kind: input, shape index: {}]
  %s5 = inlined_call_operand.vmem [shape: bf16[64,8], index: 5, kind: input, shape index: {}]
  %s6 = inlined_call_operand.vmem [shape: f32[1,8], index: 6, kind: input, shape index: {}]
  %s7 = inlined_call_operand.hbm [shape: f32[8,8], index: 7, kind: output, shape index: {}]
  %s8 = sld [smem:[#allocation0]]
  $region46: #{tpu_custom_call.1} parent=0
    _
  %s10 = ssub.s32 1, %s8
  %s11 = scalar_select 0, %s10, %s8
  $region1: #{tpu_custom_call.1} parent=0
    #allocation2 [shape = 'u8[4096]{0}', space=vmem, size = 0x1000, scoped, tag = 'input window, operand 1, single buffered']
    #allocation3 [shape = 's32[1]{0}', space=sflag, size = 0x4, scoped, tag = 'scoped memory for tpu_custom_call.1']
    #allocation4 [shape = 's32[1]{0}', space=sflag, size = 0x4, scoped, tag = 'scoped memory for tpu_custom_call.1']
    #allocation5 [shape = 'u8[512]{0}', space=vmem, size = 0x400, scoped, tag = 'input window, operand 4, single buffered']
    #allocation6 [shape = 's32[1]{0}', space=sflag, size = 0x4, scoped, tag = 'scoped memory for tpu_custom_call.1']
    #allocation7 [shape = 'u8[4096]{0}', space=vmem, size = 0x1000, scoped, tag = 'output window, operand 0, single buffered']
    %12 = vsyncpa [#allocation3], 0
    %13 = vsyncpa [#allocation6], 0
    %14 = vsyncpa [#allocation4], 0
    // Predicated region
    $region2: #{tpu_custom_call.1} parent=1 // pred_check
      _
    $region3: #{tpu_custom_call.1} parent=1 // pred_check_branch
      %16 = sbr.rel (0) target = $region5
    $region4: #{tpu_custom_call.1} parent=1 // pred_region
      _
    $region5: #{tpu_custom_call.1} parent=1 // pred_fallthru
      _
    // Predicated region
    $region6: #{tpu_custom_call.1} parent=1 // pred_check
      _
    $region7: #{tpu_custom_call.1} parent=1 // pred_check_branch
      %18 = sbr.rel (0) target = $region9
    $region8: #{tpu_custom_call.1} parent=1 // pred_region
      %s20 = ssub.s32 128, 128
      %21 = vsyncadd [#allocation3], %s20
      %s22 = sshll.u32 [#allocation2], 4
      %s23 = int_to_ptr.vmem [resolvable:$true] %s22
      %28 = dma.hbm_to_vmem [thread:$0]  %s1, 128, %s23, [#allocation3], 64, 64, 4
    $region9: #{tpu_custom_call.1} parent=1 // pred_fallthru
      _
    // Predicated region
    $region10: #{tpu_custom_call.1} parent=1 // pred_check
      _
    $region11: #{tpu_custom_call.1} parent=1 // pred_check_branch
      %30 = sbr.rel (0) target = $region13
    $region12: #{tpu_custom_call.1} parent=1 // pred_region
      _
    $region13: #{tpu_custom_call.1} parent=1 // pred_fallthru
      _
    // Predicated region
    $region14: #{tpu_custom_call.1} parent=1 // pred_check
      _
    $region15: #{tpu_custom_call.1} parent=1 // pred_check_branch
      %32 = sbr.rel (0) target = $region17
    $region16: #{tpu_custom_call.1} parent=1 // pred_region
      _
    $region17: #{tpu_custom_call.1} parent=1 // pred_fallthru
      _
    // Predicated region
    $region18: #{tpu_custom_call.1} parent=1 // pred_check
      _
    $region19: #{tpu_custom_call.1} parent=1 // pred_check_branch
      %34 = sbr.rel (0) target = $region21
    $region20: #{tpu_custom_call.1} parent=1 // pred_region
      %s36 = ssub.s32 16, 16
      %37 = vsyncadd [#allocation6], %s36
      %s39 = sshll.u32 [#allocation5], 4
      %s40 = int_to_ptr.vmem [resolvable:$true] %s39
      %42 = dma.hbm_to_vmem [thread:$0]  %s4, 16, %s40, [#allocation6]
    $region21: #{tpu_custom_call.1} parent=1 // pred_fallthru
      _
    // Predicated region
    $region22: #{tpu_custom_call.1} parent=1 // pred_check
      _
    $region23: #{tpu_custom_call.1} parent=1 // pred_check_branch
      %44 = sbr.rel (0) target = $region25
    $region24: #{tpu_custom_call.1} parent=1 // pred_region
      _
    $region25: #{tpu_custom_call.1} parent=1 // pred_fallthru
      _
    // Predicated region
    $region26: #{tpu_custom_call.1} parent=1 // pred_check
      _
    $region27: #{tpu_custom_call.1} parent=1 // pred_check_branch
      %46 = sbr.rel (0) target = $region29
    $region28: #{tpu_custom_call.1} parent=1 // pred_region
      _
    $region29: #{tpu_custom_call.1} parent=1 // pred_fallthru
      _
    // Predicated region
    $region30: #{tpu_custom_call.1} parent=1 // pred_check
      _
    $region31: #{tpu_custom_call.1} parent=1 // pred_check_branch
      %48 = sbr.rel (0) target = $region33
    $region32: #{tpu_custom_call.1} parent=1 // pred_region
      %49 = dma.done [#allocation3], 128
    $region33: #{tpu_custom_call.1} parent=1 // pred_fallthru
      _
    // Predicated region
    $region34: #{tpu_custom_call.1} parent=1 // pred_check
      _
    $region35: #{tpu_custom_call.1} parent=1 // pred_check_branch
      %51 = sbr.rel (0) target = $region37
    $region36: #{tpu_custom_call.1} parent=1 // pred_region
      %52 = dma.done [#allocation6], 16
    $region37: #{tpu_custom_call.1} parent=1 // pred_fallthru
      _
    %v54 = vld [vmem:[%s0] sm:$0xff]
    %v55 = vpack.c.bf16 %v54, %v54
    %v56 = vld [vmem:[#allocation2] sm:$0xf]
    %v57 = vld [vmem:[#allocation2 + $0x4] sm:$0xf]
    %v58 = vld [vmem:[%s2] sm:$0x1]
    %v60 = vlaneseq
    %v61 = vshrl.u32 %v60, 7
    %v62 = vsub.s32 0, %v61
    %v63 = vrot.slane %v58, %v62
    %v67 = vunpack.c.l.b16 %v56
    %v68 = vunpack.c.l.b16 %v57
    %v69 = vpack.c.b16 %v68, %v67
    %vm71 = vcmask 130048
    %v73 = vsel %vm71, %v55, 0
    %75 = vmatprep.subr.bf16.mxu0 0
    %76 = vmatpush1.bf16.msra.mxu0 0
    %77 = vmatprep.subr.bf16.mxu0 0
    %78 = vmatpush1.bf16.msra.mxu0 0
    %79 = vmatprep.subr.bf16.mxu0 0
    %80 = vmatpush1.bf16.msra.mxu0 0
    %81 = vmatprep.subr.bf16.mxu0 0
    %82 = vmatpush1.bf16.msra.mxu0 0
    %83 = vmatprep.subr.bf16.mxu0 0
    %84 = vmatpush1.bf16.msra.mxu0 0
    %85 = vmatprep.subr.bf16.mxu0 0
    %86 = vmatpush1.bf16.msra.mxu0 0
    %87 = vmatprep.subr.bf16.mxu0 0
    %88 = vmatpush1.bf16.msra.mxu0 0
    %89 = vmatprep.subr.bf16.mxu0 0
    %90 = vmatpush1.bf16.msra.mxu0 %v69
    %91 = vmatprep.subr.bf16.mxu0 0
    %92 = vmatpush2.bf16.msra.mxu0 0
    %93 = vmatprep.subr.bf16.mxu0 0
    %94 = vmatpush2.bf16.msra.mxu0 0
    %95 = vmatprep.subr.bf16.mxu0 0
    %96 = vmatpush2.bf16.msra.mxu0 0
    %97 = vmatprep.subr.bf16.mxu0 0
    %98 = vmatpush2.bf16.msra.mxu0 0
    %99 = vmatprep.subr.bf16.mxu0 0
    %100 = vmatpush2.bf16.msra.mxu0 0
    %101 = vmatprep.subr.bf16.mxu0 0
    %102 = vmatpush2.bf16.msra.mxu0 0
    %103 = vmatprep.subr.bf16.mxu0 0
    %104 = vmatpush2.bf16.msra.mxu0 0
    %105 = vmatprep.subr.bf16.mxu0 0
    %106 = vmatpush2.bf16.msra.mxu0 0
    %107 = vmatprep.mubr.bf16.mxu0 0
    %108 = vmatmul.mubr.bf16.gmra.mxu0 %v73
    %v109 = vpop.f32.mrf.mxu0
    %v110 = vadd.f32 %v63, %v109
    %v111 = vpop.f32.mrf.mxu0
    %v112 = vpop.f32.mrf.mxu0
    %v113 = vpop.f32.mrf.mxu0
    %114 = vdwg.mxu0
    %v115 = vmax.f32 %v110, 0.0
    %v116 = vpack.c.bf16 %v115, %v115
    %v117 = vld [vmem:[%s3] sm:$0xf]
    %v118 = vld [vmem:[%s3 + $0x4] sm:$0xf]
    %v119 = vld [vmem:[%s3 + $0x8] sm:$0xf]
    %v120 = vld [vmem:[%s3 + $0xc] sm:$0xf]
    %v121 = vld [vmem:[%s3 + $0x10] sm:$0xf]
    %v122 = vld [vmem:[%s3 + $0x14] sm:$0xf]
    %v123 = vld [vmem:[%s3 + $0x18] sm:$0xf]
    %v124 = vld [vmem:[%s3 + $0x1c] sm:$0xf]
    %v125 = vld [vmem:[#allocation5] sm:$0x1]
    %v127 = vlaneseq
    %v128 = vshrl.u32 %v127, 7
    %v129 = vsub.s32 0, %v128
    %v130 = vrot.slane %v125, %v129
    %v140 = vunpack.c.l.b16 %v117
    %v141 = vunpack.c.l.b16 %v118
    %v142 = vunpack.c.l.b16 %v119
    %v143 = vunpack.c.l.b16 %v120
    %v144 = vunpack.c.l.b16 %v121
    %v145 = vunpack.c.l.b16 %v122
    %v146 = vunpack.c.l.b16 %v123
    %v147 = vunpack.c.l.b16 %v124
    %v148 = vpack.c.b16 %v141, %v140
    %v149 = vpack.c.b16 %v143, %v142
    %v150 = vpack.c.b16 %v145, %v144
    %v151 = vpack.c.b16 %v147, %v146
    %vm156 = vcmask 523264
    %v158 = vsel %vm156, %v116, 0
    %160 = vmatprep.subr.bf16.mxu0 0
    %161 = vmatpush1.bf16.msra.mxu0 0
    %162 = vmatprep.subr.bf16.mxu0 0
    %163 = vmatpush1.bf16.msra.mxu0 0
    %164 = vmatprep.subr.bf16.mxu0 0
    %165 = vmatpush1.bf16.msra.mxu0 0
    %166 = vmatprep.subr.bf16.mxu0 0
    %167 = vmatpush1.bf16.msra.mxu0 0
    %168 = vmatprep.subr.bf16.mxu0 0
    %169 = vmatpush1.bf16.msra.mxu0 %v151
    %170 = vmatprep.subr.bf16.mxu0 0
    %171 = vmatpush1.bf16.msra.mxu0 %v150
    %172 = vmatprep.subr.bf16.mxu0 0
    %173 = vmatpush1.bf16.msra.mxu0 %v149
    %174 = vmatprep.subr.bf16.mxu0 0
    %175 = vmatpush1.bf16.msra.mxu0 %v148
    %176 = vmatprep.subr.bf16.mxu0 0
    %177 = vmatpush2.bf16.msra.mxu0 0
    %178 = vmatprep.subr.bf16.mxu0 0
    %179 = vmatpush2.bf16.msra.mxu0 0
    %180 = vmatprep.subr.bf16.mxu0 0
    %181 = vmatpush2.bf16.msra.mxu0 0
    %182 = vmatprep.subr.bf16.mxu0 0
    %183 = vmatpush2.bf16.msra.mxu0 0
    %184 = vmatprep.subr.bf16.mxu0 0
    %185 = vmatpush2.bf16.msra.mxu0 0
    %186 = vmatprep.subr.bf16.mxu0 0
    %187 = vmatpush2.bf16.msra.mxu0 0
    %188 = vmatprep.subr.bf16.mxu0 0
    %189 = vmatpush2.bf16.msra.mxu0 0
    %190 = vmatprep.subr.bf16.mxu0 0
    %191 = vmatpush2.bf16.msra.mxu0 0
    %192 = vmatprep.mubr.bf16.mxu0 0
    %193 = vmatmul.mubr.bf16.gmra.mxu0 %v158
    %v194 = vpop.f32.mrf.mxu0
    %v195 = vadd.f32 %v130, %v194
    %v196 = vpop.f32.mrf.mxu0
    %v197 = vpop.f32.mrf.mxu0
    %v198 = vpop.f32.mrf.mxu0
    %199 = vdwg.mxu0
    %v200 = vmax.f32 %v195, 0.0
    %v201 = vpack.c.bf16 %v200, %v200
    %v202 = vld [vmem:[%s5] sm:$0xf]
    %v203 = vld [vmem:[%s5 + $0x4] sm:$0xf]
    %v204 = vld [vmem:[%s5 + $0x8] sm:$0xf]
    %v205 = vld [vmem:[%s5 + $0xc] sm:$0xf]
    %v206 = vld [vmem:[%s5 + $0x10] sm:$0xf]
    %v207 = vld [vmem:[%s5 + $0x14] sm:$0xf]
    %v208 = vld [vmem:[%s5 + $0x18] sm:$0xf]
    %v209 = vld [vmem:[%s5 + $0x1c] sm:$0xf]
    %v210 = vld [vmem:[%s6] sm:$0x1]
    %v212 = vlaneseq
    %v213 = vshrl.u32 %v212, 7
    %v214 = vsub.s32 0, %v213
    %v215 = vrot.slane %v210, %v214
    %v225 = vunpack.c.l.b16 %v202
    %v226 = vunpack.c.l.b16 %v203
    %v227 = vunpack.c.l.b16 %v204
    %v228 = vunpack.c.l.b16 %v205
    %v229 = vunpack.c.l.b16 %v206
    %v230 = vunpack.c.l.b16 %v207
    %v231 = vunpack.c.l.b16 %v208
    %v232 = vunpack.c.l.b16 %v209
    %v233 = vpack.c.b16 %v226, %v225
    %v234 = vpack.c.b16 %v228, %v227
    %v235 = vpack.c.b16 %v230, %v229
    %v236 = vpack.c.b16 %v232, %v231
    %v242 = vsel %vm156, %v201, 0
    %244 = vmatprep.subr.bf16.mxu0 0
    %245 = vmatpush1.bf16.msra.mxu0 0
    %246 = vmatprep.subr.bf16.mxu0 0
    %247 = vmatpush1.bf16.msra.mxu0 0
    %248 = vmatprep.subr.bf16.mxu0 0
    %249 = vmatpush1.bf16.msra.mxu0 0
    %250 = vmatprep.subr.bf16.mxu0 0
    %251 = vmatpush1.bf16.msra.mxu0 0
    %252 = vmatprep.subr.bf16.mxu0 0
    %253 = vmatpush1.bf16.msra.mxu0 %v236
    %254 = vmatprep.subr.bf16.mxu0 0
    %255 = vmatpush1.bf16.msra.mxu0 %v235
    %256 = vmatprep.subr.bf16.mxu0 0
    %257 = vmatpush1.bf16.msra.mxu0 %v234
    %258 = vmatprep.subr.bf16.mxu0 0
    %259 = vmatpush1.bf16.msra.mxu0 %v233
    %260 = vmatprep.subr.bf16.mxu0 0
    %261 = vmatpush2.bf16.msra.mxu0 0
    %262 = vmatprep.subr.bf16.mxu0 0
    %263 = vmatpush2.bf16.msra.mxu0 0
    %264 = vmatprep.subr.bf16.mxu0 0
    %265 = vmatpush2.bf16.msra.mxu0 0
    %266 = vmatprep.subr.bf16.mxu0 0
    %267 = vmatpush2.bf16.msra.mxu0 0
    %268 = vmatprep.subr.bf16.mxu0 0
    %269 = vmatpush2.bf16.msra.mxu0 0
    %270 = vmatprep.subr.bf16.mxu0 0
    %271 = vmatpush2.bf16.msra.mxu0 0
    %272 = vmatprep.subr.bf16.mxu0 0
    %273 = vmatpush2.bf16.msra.mxu0 0
    %274 = vmatprep.subr.bf16.mxu0 0
    %275 = vmatpush2.bf16.msra.mxu0 0
    %276 = vmatprep.mubr.bf16.mxu0 0
    %277 = vmatmul.mubr.bf16.gmra.mxu0 %v242
    %v278 = vpop.f32.mrf.mxu0
    %v279 = vadd.f32 %v215, %v278
    %v280 = vpop.f32.mrf.mxu0
    %v281 = vpop.f32.mrf.mxu0
    %v282 = vpop.f32.mrf.mxu0
    %283 = vdwg.mxu0
    %vm284 = vcmask 64512
    %285 = vst.msk [vmem:[#allocation7] sm:$0xff] %vm284, %v279
    // Predicated region
    $region38: #{tpu_custom_call.1} parent=1 // pred_check
      _
    $region39: #{tpu_custom_call.1} parent=1 // pred_check_branch
      %287 = sbr.rel (0) target = $region41
    $region40: #{tpu_custom_call.1} parent=1 // pred_region
      %s289 = ssub.s32 128, 128
      %290 = vsyncadd [#allocation4], %s289
      %s292 = sshll.u32 [#allocation7], 4
      %s293 = int_to_ptr.vmem [resolvable:$true] %s292
      %295 = dma.vmem_to_hbm [thread:$0]  %s293, 128, %s7, [#allocation4]
    $region41: #{tpu_custom_call.1} parent=1 // pred_fallthru
      _
    // Predicated region
    $region42: #{tpu_custom_call.1} parent=1 // pred_check
      _
    $region43: #{tpu_custom_call.1} parent=1 // pred_check_branch
      %297 = sbr.rel (0) target = $region45
    $region44: #{tpu_custom_call.1} parent=1 // pred_region
      %298 = dma.done [#allocation4], 128
    $region45: #{tpu_custom_call.1} parent=1 // pred_fallthru
      _
    %299 = vsyncpa [#allocation3], 1
    %300 = vsyncpa [#allocation6], 1
    %301 = vsyncpa [#allocation4], 1

</llo_original>
